<compile_context>
chip_gen: v7x
topology: tpu7x:2x2x1
jax: 0.10.0
libtpu: 0.0.40
codegen_flags: <defaults>
</compile_context>

<pallas_src>
import functools

import numpy as np
import jax
import jax.numpy as jnp
from jax.experimental import pallas as pl
from jax.experimental.pallas import tpu as pltpu

LEAKY_SLOPE = 0.01   # torch.nn.LeakyReLU default
BN_EPS = 1e-5        # torch.nn.BatchNorm1d default


# --------------------------------------------------------------------------- #
# Pallas kernel: one grid step = one block of output channels, full batch.
# refs order: x_flat, w, (gamma, beta, mask | bias), [Sl, Sc, Sr], [U], out
# --------------------------------------------------------------------------- #
def _conv_block_kernel(*refs, K, W, norm, relu, pool, upsm, inv_count):
    it = iter(refs)
    x_ref = next(it)              # (Cin, W + K - 1)        bf16, batch folded in lanes
    w_ref = next(it)              # (K, cout_blk, Cin)       bf16
    if norm:
        gamma_ref = next(it)      # (cout_blk, 1)            f32
        beta_ref = next(it)       # (cout_blk, 1)            f32
        mask_ref = next(it)       # (1, W) 1.0 on valid conv lanes, 0.0 on pad lanes
    else:
        bias_ref = next(it)       # (cout_blk, 1)            f32
    if pool:
        sl_ref = next(it)         # (W, N*L_pool) block-diag selection (left tap)
        sc_ref = next(it)         # (W, N*L_pool) block-diag selection (center tap)
        sr_ref = next(it)         # (W, N*L_pool) block-diag selection (right tap)
    if upsm:
        u_ref = next(it)          # (cur_W, N*2*valid) block-diag linear-interp matrix
    out_ref = next(it)            # (cout_blk, W_out)        f32

    # ---- Conv1d: K accumulated matmuls on lane-shifted views (in-kernel im2col) ----
    acc = jnp.dot(w_ref[0], x_ref[:, 0:W], preferred_element_type=jnp.float32)
    for kk in range(1, K):        # K is tiny (3); static unroll is fine
        acc = acc + jnp.dot(w_ref[kk], x_ref[:, kk:kk + W],
                            preferred_element_type=jnp.float32)

    # ---- BatchNorm1d (training-mode batch stats, biased variance), f32 ----
    if norm:
        mask = mask_ref[...]                                        # (1, W)
        mean = jnp.sum(acc * mask, axis=1, keepdims=True) * inv_count
        cen = acc - mean
        var = jnp.sum(cen * cen * mask, axis=1, keepdims=True) * inv_count
        y = cen * jax.lax.rsqrt(var + BN_EPS)
        y = y * gamma_ref[...] + beta_ref[...]
    else:
        y = acc + bias_ref[...]

    # ---- LeakyReLU ----
    if relu:
        y = jnp.where(y >= 0, y, LEAKY_SLOPE * y)

    # ---- MaxPool1d(3,2,1): 3 batched selection matmuls + elementwise max ----
    if pool:
        a = jnp.dot(y, sl_ref[...], preferred_element_type=jnp.float32)
        b = jnp.dot(y, sc_ref[...], preferred_element_type=jnp.float32)
        c = jnp.dot(y, sr_ref[...], preferred_element_type=jnp.float32)
        y = jnp.maximum(jnp.maximum(a, b), c)

    # ---- Linear upsample x2 (align_corners=True), f32 interp weights ----
    if upsm:
        y = jnp.dot(y, u_ref[...], preferred_element_type=jnp.float32)

    out_ref[...] = y.astype(out_ref.dtype)


# --------------------------------------------------------------------------- #
# Host-side constant builders (per-batch blocks, kron'd into block-diag).
# --------------------------------------------------------------------------- #
def _pool_select_blocks(seg_len, valid_len):
    """MaxPool1d(3,2,1) selection matrices for one batch segment.

    Out-of-range taps are redirected to the (always valid) center index 2j,
    which leaves the max unchanged — no -inf masking required.
    """
    pk, ps, pp = 3, 2, 1
    l_pool = (valid_len + 2 * pp - pk) // ps + 1
    sl = np.zeros((seg_len, l_pool), np.float32)
    sc = np.zeros((seg_len, l_pool), np.float32)
    sr = np.zeros((seg_len, l_pool), np.float32)
    for j in range(l_pool):
        c = ps * j                      # center tap, always < valid_len
        left = c - 1 if c - 1 >= 0 else c
        right = c + 1 if c + 1 < valid_len else c
        sl[left, j] = 1.0
        sc[c, j] = 1.0
        sr[right, j] = 1.0
    return sl, sc, sr, l_pool


def _upsample_block(seg_len, valid_len):
    """Linear upsample x2, align_corners=True, for one batch segment.

    Rows >= valid_len stay zero, so this also compacts away padding lanes.
    """
    l_out = 2 * valid_len
    u = np.zeros((seg_len, l_out), np.float32)
    if valid_len == 1:
        u[0, :] = 1.0
        return u
    scale = (valid_len - 1) / (l_out - 1)
    for j in range(l_out):
        pos = j * scale
        i0 = min(int(np.floor(pos)), valid_len - 1)
        frac = pos - i0
        i1 = min(i0 + 1, valid_len - 1)
        u[i0, j] += 1.0 - frac
        u[i1, j] += frac
    return u


# --------------------------------------------------------------------------- #
# Wrapper.
# --------------------------------------------------------------------------- #
def conv_block_1d(x, weight, bias=None, gamma=None, beta=None, *,
                  kernel_size=3, stride=1, padding=1,
                  norm=False, relu=False, pool=False, upsm=False):
    # TODO(synk): stride != 1 would need an output-lane selection stage; the
    # module is only used with the default stride=1.
    assert stride == 1, "conv_block_1d Pallas kernel supports stride=1 only"

    n_b, c_in, l_in = x.shape
    c_out = weight.shape[0]
    k = kernel_size
    l_pad = l_in + 2 * padding
    l_conv = l_pad - k + 1
    w_lanes = n_b * l_pad                              # working lane width

    # Pad per batch, fold batch into the lane axis, add K-1 trailing zero lanes
    # so every conv tap is a simple static lane slice inside the kernel.
    xp = jnp.pad(x.astype(jnp.float32), ((0, 0), (0, 0), (padding, padding)))
    x_flat = jnp.transpose(xp, (1, 0, 2)).reshape(c_in, w_lanes)
    x_flat = jnp.pad(x_flat, ((0, 0), (0, k - 1))).astype(jnp.bfloat16)

    w_k = jnp.transpose(weight.astype(jnp.bfloat16), (2, 0, 1))   # (K, Cout, Cin)

    # Output-channel blocking (grid axis; independent even under BatchNorm).
    if c_out >= 128 and c_out % 128 == 0:
        cout_blk = 128
    else:
        cout_blk = c_out
    grid = (c_out // cout_blk,)

    inputs = [x_flat, w_k]
    in_specs = [
        pl.BlockSpec((c_in, w_lanes + k - 1), lambda i: (0, 0)),
        pl.BlockSpec((k, cout_blk, c_in), lambda i: (0, i, 0)),
    ]

    flops = 2.0 * c_out * c_in * k * w_lanes

    if norm:
        valid_row = np.concatenate([np.ones(l_conv, np.float32),
                                    np.zeros(l_pad - l_conv, np.float32)])
        mask_np = np.tile(valid_row, n_b).reshape(1, w_lanes)
        inputs += [gamma.reshape(c_out, 1).astype(jnp.float32),
                   beta.reshape(c_out, 1).astype(jnp.float32),
                   jnp.asarray(mask_np)]
        in_specs += [pl.BlockSpec((cout_blk, 1), lambda i: (i, 0)),
                     pl.BlockSpec((cout_blk, 1), lambda i: (i, 0)),
                     pl.BlockSpec((1, w_lanes), lambda i: (0, 0))]
    else:
        inputs += [bias.reshape(c_out, 1).astype(jnp.float32)]
        in_specs += [pl.BlockSpec((cout_blk, 1), lambda i: (i, 0))]

    cur_w = w_lanes        # current working lane width inside the kernel
    seg = l_pad            # per-batch segment length in the current layout
    valid = l_conv         # valid prefix of each segment

    if pool:
        sl_b, sc_b, sr_b, l_pool = _pool_select_blocks(seg, valid)
        eye = np.eye(n_b, dtype=np.float32)
        for blk in (sl_b, sc_b, sr_b):
            inputs.append(jnp.asarray(np.kron(eye, blk)))
            in_specs.append(pl.BlockSpec((cur_w, n_b * l_pool), lambda i: (0, 0)))
        flops += 3 * 2.0 * c_out * cur_w * n_b * l_pool
        cur_w = n_b * l_pool
        seg = l_pool
        valid = l_pool

    if upsm:
        u_b = _upsample_block(seg, valid)
        u_full = np.kron(np.eye(n_b, dtype=np.float32), u_b)     # f32 interp weights
        inputs.append(jnp.asarray(u_full))
        in_specs.append(pl.BlockSpec((cur_w, n_b * 2 * valid), lambda i: (0, 0)))
        flops += 2.0 * c_out * cur_w * n_b * 2 * valid
        cur_w = n_b * 2 * valid
        seg = 2 * valid
        valid = 2 * valid

    w_out = cur_w

    kernel = functools.partial(
        _conv_block_kernel, K=k, W=w_lanes, norm=norm, relu=relu, pool=pool,
        upsm=upsm, inv_count=1.0 / float(n_b * l_conv))

    bytes_accessed = int(x_flat.size * 2 + w_k.size * 2 + c_out * w_out * 4
                         + sum(int(np.prod(a.shape)) * 4 for a in inputs[2:]))

    out2d = pl.pallas_call(
        kernel,
        out_shape=jax.ShapeDtypeStruct((c_out, w_out), jnp.float32),
        grid=grid,
        in_specs=in_specs,
        out_specs=pl.BlockSpec((cout_blk, w_out), lambda i: (i, 0)),
        compiler_params=pltpu.CompilerParams(
            dimension_semantics=("parallel",),
            vmem_limit_bytes=32 * 1024 * 1024),
        cost_estimate=pl.CostEstimate(flops=int(flops), transcendentals=0,
                                      bytes_accessed=bytes_accessed),
    )(*inputs)

    # Back to (N, Cout, L_final).
    # TODO(synk): for very large N*L the working width should also be gridded
    # (needs a two-pass BatchNorm); fine for this module's shapes.
    if pool or upsm:
        l_final = w_out // n_b
        return jnp.transpose(out2d.reshape(c_out, n_b, l_final), (1, 0, 2))
    # conv-only: strip the (garbage) padding lanes of each batch segment.
    return jnp.transpose(out2d.reshape(c_out, n_b, l_pad)[:, :, :l_conv], (1, 0, 2))


# --------------------------------------------------------------------------- #
# Pure-JAX reference (no torch) for validation.
# --------------------------------------------------------------------------- #
def reference(x, weight, bias, gamma, beta, *, stride=1, padding=1,
              norm=False, relu=False, pool=False, upsm=False):
    y = jax.lax.conv_general_dilated(
        x.astype(jnp.float32), weight.astype(jnp.float32),
        window_strides=(stride,), padding=[(padding, padding)],
        dimension_numbers=("NCH", "OIH", "NCH"))
    if norm:
        mean = jnp.mean(y, axis=(0, 2), keepdims=True)
        var = jnp.mean((y - mean) ** 2, axis=(0, 2), keepdims=True)
        y = (y - mean) / jnp.sqrt(var + BN_EPS)
        y = y * gamma[None, :, None] + beta[None, :, None]
    else:
        y = y + bias[None, :, None]
    if relu:
        y = jnp.where(y >= 0, y, LEAKY_SLOPE * y)
    if pool:
        y = jax.lax.reduce_window(y, -jnp.inf, jax.lax.max,
                                  (1, 1, 3), (1, 1, 2),
                                  [(0, 0), (0, 0), (1, 1)])
    if upsm:
        l_i = y.shape[-1]
        l_o = 2 * l_i
        pos = jnp.arange(l_o) * (l_i - 1) / (l_o - 1)
        i0 = jnp.clip(jnp.floor(pos).astype(jnp.int32), 0, l_i - 1)
        i1 = jnp.clip(i0 + 1, 0, l_i - 1)
        frac = pos - i0
        y = y[..., i0] * (1.0 - frac) + y[..., i1] * frac
    return y


if __name__ == "__main__":
    key = jax.random.PRNGKey(0)
    kx, kw, kb, kg, kbe = jax.random.split(key, 5)
    N, CIN, COUT, L, K = 2, 4, 8, 16, 3

    x = jax.random.normal(kx, (N, CIN, L), jnp.float32)
    weight = 0.3 * jax.random.normal(kw, (COUT, CIN, K), jnp.float32)
    bias = 0.1 * jax.random.normal(kb, (COUT,), jnp.float32)
    gamma = 1.0 + 0.1 * jax.random.normal(kg, (COUT,), jnp.float32)
    beta = 0.1 * jax.random.normal(kbe, (COUT,), jnp.float32)

    # Config A: ConvBlock1D(4, 8, norm=True, relu=True, pool=True, upsm=True)
    # (BatchNorm in training mode -> batch statistics; running-stat buffers not modeled)
    out_a = conv_block_1d(x, weight, gamma=gamma, beta=beta,
                          norm=True, relu=True, pool=True, upsm=True)
    out_a = jax.block_until_ready(out_a)
    ref_a = reference(x, weight, None, gamma, beta,
                      norm=True, relu=True, pool=True, upsm=True)
    np.testing.assert_allclose(np.asarray(out_a), np.asarray(ref_a),
                               rtol=5e-2, atol=5e-2)

    # Config B: ConvBlock1D(4, 8) defaults -> conv + bias only
    out_b = conv_block_1d(x, weight, bias=bias)
    out_b = jax.block_until_ready(out_b)
    ref_b = reference(x, weight, bias, None, None)
    np.testing.assert_allclose(np.asarray(out_b), np.asarray(ref_b),
                               rtol=5e-2, atol=5e-2)

    print("KERNEL_OK")
</pallas_src>

<mosaic_0001>
module attributes {stable_mosaic.version = 11 : i64} {
  func.func @_conv_block_kernel(%arg0: i32, %arg1: memref<4x38xbf16, #tpu.memory_space<vmem>>, %arg2: memref<3x8x4xbf16, #tpu.memory_space<vmem>>, %arg3: memref<8x1xf32, #tpu.memory_space<vmem>>, %arg4: memref<8x1xf32, #tpu.memory_space<vmem>>, %arg5: memref<1x36xf32, #tpu.memory_space<vmem>>, %arg6: memref<36x16xf32, #tpu.memory_space<vmem>>, %arg7: memref<36x16xf32, #tpu.memory_space<vmem>>, %arg8: memref<36x16xf32, #tpu.memory_space<vmem>>, %arg9: memref<16x32xf32, #tpu.memory_space<vmem>>, %arg10: memref<8x32xf32, #tpu.memory_space<vmem>>) attributes {dimension_semantics = [#tpu.dimension_semantics<parallel>], iteration_bounds = array<i64: 1>, scalar_prefetch = 0 : i64, scratch_operands = 0 : i64, tpu.core_type = #tpu.core_type<tc>, window_params = [{pipeline_mode = #tpu.pipeline_mode<synchronous>, transform_indices = @transform_0, window_bounds = array<i64: 4, 38>}, {transform_indices = @transform_1, window_bounds = array<i64: 3, 8, 4>}, {transform_indices = @transform_2, window_bounds = array<i64: 8, 1>}, {transform_indices = @transform_3, window_bounds = array<i64: 8, 1>}, {pipeline_mode = #tpu.pipeline_mode<synchronous>, transform_indices = @transform_4, window_bounds = array<i64: 1, 36>}, {pipeline_mode = #tpu.pipeline_mode<synchronous>, transform_indices = @transform_5, window_bounds = array<i64: 36, 16>}, {pipeline_mode = #tpu.pipeline_mode<synchronous>, transform_indices = @transform_6, window_bounds = array<i64: 36, 16>}, {pipeline_mode = #tpu.pipeline_mode<synchronous>, transform_indices = @transform_7, window_bounds = array<i64: 36, 16>}, {pipeline_mode = #tpu.pipeline_mode<synchronous>, transform_indices = @transform_8, window_bounds = array<i64: 16, 32>}, {transform_indices = @transform_9, window_bounds = array<i64: 8, 32>}]} {
    %c0 = arith.constant 0 : index
    %c0_0 = arith.constant 0 : index
    %c0_1 = arith.constant 0 : index
    %0 = vector.load %arg2[%c0, %c0_0, %c0_1] : memref<3x8x4xbf16, #tpu.memory_space<vmem>>, vector<1x8x4xbf16>
    %1 = vector.shape_cast %0 : vector<1x8x4xbf16> to vector<8x4xbf16>
    %c0_2 = arith.constant 0 : index
    %c0_3 = arith.constant 0 : index
    %2 = vector.load %arg1[%c0_2, %c0_3] : memref<4x38xbf16, #tpu.memory_space<vmem>>, vector<4x36xbf16>
    %cst = arith.constant dense<0.000000e+00> : vector<8x36xf32>
    %3 = tpu.matmul %1, %2, %cst {dimension_numbers = #tpu.dot_dimension_numbers<[1], [0], [0], [1], [0, 0, 1, 1], [], []>} : vector<8x4xbf16>, vector<4x36xbf16>, vector<8x36xf32> -> vector<8x36xf32>
    %c1 = arith.constant 1 : index
    %c0_4 = arith.constant 0 : index
    %c0_5 = arith.constant 0 : index
    %4 = vector.load %arg2[%c1, %c0_4, %c0_5] : memref<3x8x4xbf16, #tpu.memory_space<vmem>>, vector<1x8x4xbf16>
    %5 = vector.shape_cast %4 : vector<1x8x4xbf16> to vector<8x4xbf16>
    %c0_6 = arith.constant 0 : index
    %c1_7 = arith.constant 1 : index
    %6 = vector.load %arg1[%c0_6, %c1_7] : memref<4x38xbf16, #tpu.memory_space<vmem>>, vector<4x36xbf16>
    %cst_8 = arith.constant dense<0.000000e+00> : vector<8x36xf32>
    %7 = tpu.matmul %5, %6, %cst_8 {dimension_numbers = #tpu.dot_dimension_numbers<[1], [0], [0], [1], [0, 0, 1, 1], [], []>} : vector<8x4xbf16>, vector<4x36xbf16>, vector<8x36xf32> -> vector<8x36xf32>
    %8 = arith.addf %3, %7 : vector<8x36xf32>
    %c2 = arith.constant 2 : index
    %c0_9 = arith.constant 0 : index
    %c0_10 = arith.constant 0 : index
    %9 = vector.load %arg2[%c2, %c0_9, %c0_10] : memref<3x8x4xbf16, #tpu.memory_space<vmem>>, vector<1x8x4xbf16>
    %10 = vector.shape_cast %9 : vector<1x8x4xbf16> to vector<8x4xbf16>
    %c0_11 = arith.constant 0 : index
    %c2_12 = arith.constant 2 : index
    %11 = vector.load %arg1[%c0_11, %c2_12] : memref<4x38xbf16, #tpu.memory_space<vmem>>, vector<4x36xbf16>
    %cst_13 = arith.constant dense<0.000000e+00> : vector<8x36xf32>
    %12 = tpu.matmul %10, %11, %cst_13 {dimension_numbers = #tpu.dot_dimension_numbers<[1], [0], [0], [1], [0, 0, 1, 1], [], []>} : vector<8x4xbf16>, vector<4x36xbf16>, vector<8x36xf32> -> vector<8x36xf32>
    %13 = arith.addf %8, %12 : vector<8x36xf32>
    %c0_14 = arith.constant 0 : index
    %c0_15 = arith.constant 0 : index
    %14 = vector.load %arg5[%c0_14, %c0_15] : memref<1x36xf32, #tpu.memory_space<vmem>>, vector<1x36xf32>
    %15 = vector.broadcast %14 : vector<1x36xf32> to vector<8x36xf32>
    %16 = arith.mulf %13, %15 : vector<8x36xf32>
    %cst_16 = arith.constant dense<0.000000e+00> : vector<8xf32>
    %17 = vector.multi_reduction <add>, %16, %cst_16 [1] : vector<8x36xf32> to vector<8xf32>
    %18 = vector.shape_cast %17 : vector<8xf32> to vector<8x1xf32>
    %cst_17 = arith.constant 3.125000e-02 : f32
    %19 = vector.broadcast %cst_17 : f32 to vector<8x1xf32>
    %20 = arith.mulf %18, %19 : vector<8x1xf32>
    %21 = vector.broadcast %20 : vector<8x1xf32> to vector<8x36xf32>
    %22 = arith.subf %13, %21 : vector<8x36xf32>
    %23 = arith.mulf %22, %22 : vector<8x36xf32>
    %24 = vector.broadcast %14 : vector<1x36xf32> to vector<8x36xf32>
    %25 = arith.mulf %23, %24 : vector<8x36xf32>
    %cst_18 = arith.constant dense<0.000000e+00> : vector<8xf32>
    %26 = vector.multi_reduction <add>, %25, %cst_18 [1] : vector<8x36xf32> to vector<8xf32>
    %27 = vector.shape_cast %26 : vector<8xf32> to vector<8x1xf32>
    %cst_19 = arith.constant 3.125000e-02 : f32
    %28 = vector.broadcast %cst_19 : f32 to vector<8x1xf32>
    %29 = arith.mulf %27, %28 : vector<8x1xf32>
    %cst_20 = arith.constant 9.99999974E-6 : f32
    %30 = vector.broadcast %cst_20 : f32 to vector<8x1xf32>
    %31 = arith.addf %29, %30 : vector<8x1xf32>
    %32 = math.rsqrt %31 : vector<8x1xf32>
    %33 = vector.broadcast %32 : vector<8x1xf32> to vector<8x36xf32>
    %34 = arith.mulf %22, %33 : vector<8x36xf32>
    %c0_21 = arith.constant 0 : index
    %c0_22 = arith.constant 0 : index
    %35 = vector.load %arg3[%c0_21, %c0_22] : memref<8x1xf32, #tpu.memory_space<vmem>>, vector<8x1xf32>
    %36 = vector.broadcast %35 : vector<8x1xf32> to vector<8x36xf32>
    %37 = arith.mulf %34, %36 : vector<8x36xf32>
    %c0_23 = arith.constant 0 : index
    %c0_24 = arith.constant 0 : index
    %38 = vector.load %arg4[%c0_23, %c0_24] : memref<8x1xf32, #tpu.memory_space<vmem>>, vector<8x1xf32>
    %39 = vector.broadcast %38 : vector<8x1xf32> to vector<8x36xf32>
    %40 = arith.addf %37, %39 : vector<8x36xf32>
    %cst_25 = arith.constant 0.000000e+00 : f32
    %41 = vector.broadcast %cst_25 : f32 to vector<8x36xf32>
    %42 = arith.cmpf oge, %40, %41 : vector<8x36xf32>
    %cst_26 = arith.constant 0.00999999977 : f32
    %43 = vector.broadcast %cst_26 : f32 to vector<8x36xf32>
    %44 = arith.mulf %43, %40 : vector<8x36xf32>
    %45 = arith.select %42, %40, %44 : vector<8x36xi1>, vector<8x36xf32>
    %c0_27 = arith.constant 0 : index
    %c0_28 = arith.constant 0 : index
    %46 = vector.load %arg6[%c0_27, %c0_28] : memref<36x16xf32, #tpu.memory_space<vmem>>, vector<36x16xf32>
    %cst_29 = arith.constant dense<0.000000e+00> : vector<8x16xf32>
    %47 = tpu.matmul %45, %46, %cst_29 {dimension_numbers = #tpu.dot_dimension_numbers<[1], [0], [0], [1], [0, 0, 1, 1], [], []>} : vector<8x36xf32>, vector<36x16xf32>, vector<8x16xf32> -> vector<8x16xf32>
    %c0_30 = arith.constant 0 : index
    %c0_31 = arith.constant 0 : index
    %48 = vector.load %arg7[%c0_30, %c0_31] : memref<36x16xf32, #tpu.memory_space<vmem>>, vector<36x16xf32>
    %cst_32 = arith.constant dense<0.000000e+00> : vector<8x16xf32>
    %49 = tpu.matmul %45, %48, %cst_32 {dimension_numbers = #tpu.dot_dimension_numbers<[1], [0], [0], [1], [0, 0, 1, 1], [], []>} : vector<8x36xf32>, vector<36x16xf32>, vector<8x16xf32> -> vector<8x16xf32>
    %c0_33 = arith.constant 0 : index
    %c0_34 = arith.constant 0 : index
    %50 = vector.load %arg8[%c0_33, %c0_34] : memref<36x16xf32, #tpu.memory_space<vmem>>, vector<36x16xf32>
    %cst_35 = arith.constant dense<0.000000e+00> : vector<8x16xf32>
    %51 = tpu.matmul %45, %50, %cst_35 {dimension_numbers = #tpu.dot_dimension_numbers<[1], [0], [0], [1], [0, 0, 1, 1], [], []>} : vector<8x36xf32>, vector<36x16xf32>, vector<8x16xf32> -> vector<8x16xf32>
    %52 = arith.maximumf %47, %49 : vector<8x16xf32>
    %53 = arith.maximumf %52, %51 : vector<8x16xf32>
    %c0_36 = arith.constant 0 : index
    %c0_37 = arith.constant 0 : index
    %54 = vector.load %arg9[%c0_36, %c0_37] : memref<16x32xf32, #tpu.memory_space<vmem>>, vector<16x32xf32>
    %cst_38 = arith.constant dense<0.000000e+00> : vector<8x32xf32>
    %55 = tpu.matmul %53, %54, %cst_38 {dimension_numbers = #tpu.dot_dimension_numbers<[1], [0], [0], [1], [0, 0, 1, 1], [], []>} : vector<8x16xf32>, vector<16x32xf32>, vector<8x32xf32> -> vector<8x32xf32>
    %c0_39 = arith.constant 0 : index
    %c0_40 = arith.constant 0 : index
    %56 = vector.load %arg10[%c0_39, %c0_40] : memref<8x32xf32, #tpu.memory_space<vmem>>, vector<8x32xf32>
    tpu.vector_store %arg10[%c0_39, %c0_40], %55 {strides = array<i32>} : memref<8x32xf32, #tpu.memory_space<vmem>>, vector<8x32xf32>,
    return
  }
  func.func @transform_0(%arg0: i32) -> (i32, i32) {
    %c0_i32 = arith.constant 0 : i32
    %c0_i32_0 = arith.constant 0 : i32
    %c0_i32_1 = arith.constant 0 : i32
    return %c0_i32, %c0_i32_0 : i32, i32
  }
  func.func @transform_1(%arg0: i32) -> (i32, i32, i32) {
    %c0_i32 = arith.constant 0 : i32
    %c0_i32_0 = arith.constant 0 : i32
    %c0_i32_1 = arith.constant 0 : i32
    return %c0_i32, %arg0, %c0_i32_0 : i32, i32, i32
  }
  func.func @transform_2(%arg0: i32) -> (i32, i32) {
    %c0_i32 = arith.constant 0 : i32
    %c0_i32_0 = arith.constant 0 : i32
    return %arg0, %c0_i32 : i32, i32
  }
  func.func @transform_3(%arg0: i32) -> (i32, i32) {
    %c0_i32 = arith.constant 0 : i32
    %c0_i32_0 = arith.constant 0 : i32
    return %arg0, %c0_i32 : i32, i32
  }
  func.func @transform_4(%arg0: i32) -> (i32, i32) {
    %c0_i32 = arith.constant 0 : i32
    %c0_i32_0 = arith.constant 0 : i32
    %c0_i32_1 = arith.constant 0 : i32
    return %c0_i32, %c0_i32_0 : i32, i32
  }
  func.func @transform_5(%arg0: i32) -> (i32, i32) {
    %c0_i32 = arith.constant 0 : i32
    %c0_i32_0 = arith.constant 0 : i32
    %c0_i32_1 = arith.constant 0 : i32
    return %c0_i32, %c0_i32_0 : i32, i32
  }
  func.func @transform_6(%arg0: i32) -> (i32, i32) {
    %c0_i32 = arith.constant 0 : i32
    %c0_i32_0 = arith.constant 0 : i32
    %c0_i32_1 = arith.constant 0 : i32
    return %c0_i32, %c0_i32_0 : i32, i32
  }
  func.func @transform_7(%arg0: i32) -> (i32, i32) {
    %c0_i32 = arith.constant 0 : i32
    %c0_i32_0 = arith.constant 0 : i32
    %c0_i32_1 = arith.constant 0 : i32
    return %c0_i32, %c0_i32_0 : i32, i32
  }
  func.func @transform_8(%arg0: i32) -> (i32, i32) {
    %c0_i32 = arith.constant 0 : i32
    %c0_i32_0 = arith.constant 0 : i32
    %c0_i32_1 = arith.constant 0 : i32
    return %c0_i32, %c0_i32_0 : i32, i32
  }
  func.func @transform_9(%arg0: i32) -> (i32, i32) {
    %c0_i32 = arith.constant 0 : i32
    %c0_i32_0 = arith.constant 0 : i32
    return %arg0, %c0_i32 : i32, i32
  }
}

</mosaic_0001>

<llo_original>
// kernel: tpu_custom_call.1
$region0: #{tpu_custom_call.1}
  #allocation0 [shape = 'u32[]', space=smem, size = 0x4, offset = 0x4, fixed_abs, tag = 'smem constant byte address 0x4 - core index']
  #allocation1 [shape = 'u32[144,128]{1,0:T(1,128)}', space=vmem, size = 0x12000, scoped, tag = 'internal scratch']
  %s0 = inlined_call_operand.vmem [shape: bf16[4,38], index: 0, kind: input, shape index: {}]
  %s1 = inlined_call_operand.vmem [shape: bf16[3,8,4], index: 1, kind: input, shape index: {}]
  %s2 = inlined_call_operand.vmem [shape: f32[8,1], index: 2, kind: input, shape index: {}]
  %s3 = inlined_call_operand.vmem [shape: f32[8,1], index: 3, kind: input, shape index: {}]
  %s4 = inlined_call_operand.vmem [shape: f32[1,36], index: 4, kind: input, shape index: {}]
  %s5 = inlined_call_operand.vmem [shape: f32[36,16], index: 5, kind: input, shape index: {}]
  %s6 = inlined_call_operand.vmem [shape: f32[36,16], index: 6, kind: input, shape index: {}]
  %s7 = inlined_call_operand.vmem [shape: f32[36,16], index: 7, kind: input, shape index: {}]
  %s8 = inlined_call_operand.vmem [shape: f32[16,32], index: 8, kind: input, shape index: {}]
  %s9 = inlined_call_operand.hbm [shape: f32[8,32], index: 9, kind: output, shape index: {}]
  %s10 = sld [smem:[#allocation0]]
  $region46: #{tpu_custom_call.1} parent=0
    _
  %s12 = ssub.s32 1, %s10
  %s13 = scalar_select 0, %s12, %s10
  $region1: #{tpu_custom_call.1} parent=0
    #allocation2 [shape = 'u8[4096]{0}', space=vmem, size = 0x1000, scoped, tag = 'output window, operand 0, single buffered']
    #allocation3 [shape = 's32[1]{0}', space=sflag, size = 0x4, scoped, tag = 'scoped memory for tpu_custom_call.1']
    %14 = vsyncpa [#allocation3], 0
    // Predicated region
    $region2: #{tpu_custom_call.1} parent=1 // pred_check
      _
    $region3: #{tpu_custom_call.1} parent=1 // pred_check_branch
      %16 = sbr.rel (0) target = $region5
    $region4: #{tpu_custom_call.1} parent=1 // pred_region
      _
    $region5: #{tpu_custom_call.1} parent=1 // pred_fallthru
      _
    // Predicated region
    $region6: #{tpu_custom_call.1} parent=1 // pred_check
      _
    $region7: #{tpu_custom_call.1} parent=1 // pred_check_branch
      %18 = sbr.rel (0) target = $region9
    $region8: #{tpu_custom_call.1} parent=1 // pred_region
      _
    $region9: #{tpu_custom_call.1} parent=1 // pred_fallthru
      _
    // Predicated region
    $region10: #{tpu_custom_call.1} parent=1 // pred_check
      _
    $region11: #{tpu_custom_call.1} parent=1 // pred_check_branch
      %20 = sbr.rel (0) target = $region13
    $region12: #{tpu_custom_call.1} parent=1 // pred_region
      _
    $region13: #{tpu_custom_call.1} parent=1 // pred_fallthru
      _
    // Predicated region
    $region14: #{tpu_custom_call.1} parent=1 // pred_check
      _
    $region15: #{tpu_custom_call.1} parent=1 // pred_check_branch
      %22 = sbr.rel (0) target = $region17
    $region16: #{tpu_custom_call.1} parent=1 // pred_region
      _
    $region17: #{tpu_custom_call.1} parent=1 // pred_fallthru
      _
    // Predicated region
    $region18: #{tpu_custom_call.1} parent=1 // pred_check
      _
    $region19: #{tpu_custom_call.1} parent=1 // pred_check_branch
      %24 = sbr.rel (0) target = $region21
    $region20: #{tpu_custom_call.1} parent=1 // pred_region
      _
    $region21: #{tpu_custom_call.1} parent=1 // pred_fallthru
      _
    // Predicated region
    $region22: #{tpu_custom_call.1} parent=1 // pred_check
      _
    $region23: #{tpu_custom_call.1} parent=1 // pred_check_branch
      %26 = sbr.rel (0) target = $region25
    $region24: #{tpu_custom_call.1} parent=1 // pred_region
      _
    $region25: #{tpu_custom_call.1} parent=1 // pred_fallthru
      _
    // Predicated region
    $region26: #{tpu_custom_call.1} parent=1 // pred_check
      _
    $region27: #{tpu_custom_call.1} parent=1 // pred_check_branch
      %28 = sbr.rel (0) target = $region29
    $region28: #{tpu_custom_call.1} parent=1 // pred_region
      _
    $region29: #{tpu_custom_call.1} parent=1 // pred_fallthru
      _
    // Predicated region
    $region30: #{tpu_custom_call.1} parent=1 // pred_check
      _
    $region31: #{tpu_custom_call.1} parent=1 // pred_check_branch
      %30 = sbr.rel (0) target = $region33
    $region32: #{tpu_custom_call.1} parent=1 // pred_region
      _
    $region33: #{tpu_custom_call.1} parent=1 // pred_fallthru
      _
    // Predicated region
    $region34: #{tpu_custom_call.1} parent=1 // pred_check
      _
    $region35: #{tpu_custom_call.1} parent=1 // pred_check_branch
      %32 = sbr.rel (0) target = $region37
    $region36: #{tpu_custom_call.1} parent=1 // pred_region
      _
    $region37: #{tpu_custom_call.1} parent=1 // pred_fallthru
      _
    %v34 = vld [vmem:[%s1] sm:$0xf]
    %v35 = vld [vmem:[%s0] sm:$0x3]
    %s36 = scalar_lea.vmem %s1, 4
    %v37 = vld [vmem:[%s36] sm:$0xf]
    %v40 = vunpack.c.l.s4 1983009808
    %v41 = vunpack.c.0.s8 %v40
    %v42 = vlaneseq
    %v43 = vshrl.u32 %v42, 7
    %v44 = vsub.s32 %v41, %v43
    %v45 = vrot.slane %v35, %v44
    %46 = vrot.lane.b32.xlu0 %v45, 127
    %v47 = vpop.permute.xlu0 %46
    %vm48 = vcmask 31744
    %v50 = vsel %vm48, %v37, 0
    %vm52 = vcmask 1041408
    %v54 = vsel %vm52, %v47, 0
    %56 = vmatprep.subr.bf16.mxu0 0
    %57 = vmatpush1.bf16.msra.mxu0 %v54
    %58 = vmatprep.subr.bf16.mxu0 0
    %59 = vmatpush1.bf16.msra.mxu0 0
    %60 = vmatprep.subr.bf16.mxu0 0
    %61 = vmatpush1.bf16.msra.mxu0 0
    %62 = vmatprep.subr.bf16.mxu0 0
    %63 = vmatpush1.bf16.msra.mxu0 0
    %64 = vmatprep.subr.bf16.mxu0 0
    %65 = vmatpush1.bf16.msra.mxu0 0
    %66 = vmatprep.subr.bf16.mxu0 0
    %67 = vmatpush1.bf16.msra.mxu0 0
    %68 = vmatprep.subr.bf16.mxu0 0
    %69 = vmatpush1.bf16.msra.mxu0 0
    %70 = vmatprep.subr.bf16.mxu0 0
    %71 = vmatpush1.bf16.msra.mxu0 0
    %72 = vmatprep.subr.bf16.mxu0 0
    %73 = vmatpush1.bf16.msra.mxu0 0
    %74 = vmatprep.subr.bf16.mxu0 0
    %75 = vmatpush1.bf16.msra.mxu0 0
    %76 = vmatprep.subr.bf16.mxu0 0
    %77 = vmatpush1.bf16.msra.mxu0 0
    %78 = vmatprep.subr.bf16.mxu0 0
    %79 = vmatpush1.bf16.msra.mxu0 0
    %80 = vmatprep.subr.bf16.mxu0 0
    %81 = vmatpush1.bf16.msra.mxu0 0
    %82 = vmatprep.subr.bf16.mxu0 0
    %83 = vmatpush1.bf16.msra.mxu0 0
    %84 = vmatprep.subr.bf16.mxu0 0
    %85 = vmatpush1.bf16.msra.mxu0 0
    %86 = vmatprep.subr.bf16.mxu0 0
    %87 = vmatpush1.bf16.msra.mxu0 0
    %88 = vmatprep.mubr.bf16.mxu0 0
    %89 = vmatmul.mubr.bf16.gmra.mrb[0].mxu0 %v50
    %v90 = vpop.f32.mrb[0].mxu0
    %v91 = vadd.f32 0.0, %v90
    %v92 = vpop.f32.mrb[0].mxu0
    %v93 = vpop.f32.mrb[0].mxu0
    %v94 = vpop.f32.mrb[0].mxu0
    %95 = vdwg.mxu0
    %v97 = vsel %vm48, %v34, 0
    %v100 = vsel %vm52, %v35, 0
    %102 = vmatprep.subr.bf16.mxu0 0
    %103 = vmatpush1.bf16.msra.mxu0 %v100
    %104 = vmatprep.subr.bf16.mxu0 0
    %105 = vmatpush1.bf16.msra.mxu0 0
    %106 = vmatprep.subr.bf16.mxu0 0
    %107 = vmatpush1.bf16.msra.mxu0 0
    %108 = vmatprep.subr.bf16.mxu0 0
    %109 = vmatpush1.bf16.msra.mxu0 0
    %110 = vmatprep.subr.bf16.mxu0 0
    %111 = vmatpush1.bf16.msra.mxu0 0
    %112 = vmatprep.subr.bf16.mxu0 0
    %113 = vmatpush1.bf16.msra.mxu0 0
    %114 = vmatprep.subr.bf16.mxu0 0
    %115 = vmatpush1.bf16.msra.mxu0 0
    %116 = vmatprep.subr.bf16.mxu0 0
    %117 = vmatpush1.bf16.msra.mxu0 0
    %118 = vmatprep.subr.bf16.mxu0 0
    %119 = vmatpush1.bf16.msra.mxu0 0
    %120 = vmatprep.subr.bf16.mxu0 0
    %121 = vmatpush1.bf16.msra.mxu0 0
    %122 = vmatprep.subr.bf16.mxu0 0
    %123 = vmatpush1.bf16.msra.mxu0 0
    %124 = vmatprep.subr.bf16.mxu0 0
    %125 = vmatpush1.bf16.msra.mxu0 0
    %126 = vmatprep.subr.bf16.mxu0 0
    %127 = vmatpush1.bf16.msra.mxu0 0
    %128 = vmatprep.subr.bf16.mxu0 0
    %129 = vmatpush1.bf16.msra.mxu0 0
    %130 = vmatprep.subr.bf16.mxu0 0
    %131 = vmatpush1.bf16.msra.mxu0 0
    %132 = vmatprep.subr.bf16.mxu0 0
    %133 = vmatpush1.bf16.msra.mxu0 0
    %134 = vmatprep.mubr.bf16.mxu0 0
    %135 = vmatmul.mubr.bf16.gmra.mrb[0].mxu0 %v97
    %v136 = vpop.f32.mrb[0].mxu0
    %v137 = vadd.f32 %v91, %v136
    %v138 = vpop.f32.mrb[0].mxu0
    %v139 = vpop.f32.mrb[0].mxu0
    %v140 = vpop.f32.mrb[0].mxu0
    %141 = vdwg.mxu0
    %s142 = scalar_lea.vmem %s1, 8
    %v143 = vld [vmem:[%s142] sm:$0xf]
    %v144 = vld [vmem:[%s0] sm:$0x3]
    %v147 = vunpack.c.l.s4 1983009808
    %v148 = vunpack.c.0.s8 %v147
    %v149 = vlaneseq
    %v150 = vshrl.u32 %v149, 7
    %v151 = vsub.s32 %v148, %v150
    %v152 = vrot.slane %v144, %v151
    %153 = vrot.lane.b32.xlu0 %v152, 126
    %v154 = vpop.permute.xlu0 %153
    %v156 = vsel %vm48, %v143, 0
    %v159 = vsel %vm52, %v154, 0
    %161 = vmatprep.subr.bf16.mxu0 0
    %162 = vmatpush1.bf16.msra.mxu0 %v159
    %163 = vmatprep.subr.bf16.mxu0 0
    %164 = vmatpush1.bf16.msra.mxu0 0
    %165 = vmatprep.subr.bf16.mxu0 0
    %166 = vmatpush1.bf16.msra.mxu0 0
    %167 = vmatprep.subr.bf16.mxu0 0
    %168 = vmatpush1.bf16.msra.mxu0 0
    %169 = vmatprep.subr.bf16.mxu0 0
    %170 = vmatpush1.bf16.msra.mxu0 0
    %171 = vmatprep.subr.bf16.mxu0 0
    %172 = vmatpush1.bf16.msra.mxu0 0
    %173 = vmatprep.subr.bf16.mxu0 0
    %174 = vmatpush1.bf16.msra.mxu0 0
    %175 = vmatprep.subr.bf16.mxu0 0
    %176 = vmatpush1.bf16.msra.mxu0 0
    %177 = vmatprep.subr.bf16.mxu0 0
    %178 = vmatpush1.bf16.msra.mxu0 0
    %179 = vmatprep.subr.bf16.mxu0 0
    %180 = vmatpush1.bf16.msra.mxu0 0
    %181 = vmatprep.subr.bf16.mxu0 0
    %182 = vmatpush1.bf16.msra.mxu0 0
    %183 = vmatprep.subr.bf16.mxu0 0
    %184 = vmatpush1.bf16.msra.mxu0 0
    %185 = vmatprep.subr.bf16.mxu0 0
    %186 = vmatpush1.bf16.msra.mxu0 0
    %187 = vmatprep.subr.bf16.mxu0 0
    %188 = vmatpush1.bf16.msra.mxu0 0
    %189 = vmatprep.subr.bf16.mxu0 0
    %190 = vmatpush1.bf16.msra.mxu0 0
    %191 = vmatprep.subr.bf16.mxu0 0
    %192 = vmatpush1.bf16.msra.mxu0 0
    %193 = vmatprep.mubr.bf16.mxu0 0
    %194 = vmatmul.mubr.bf16.gmra.mrb[0].mxu0 %v156
    %v195 = vpop.f32.mrb[0].mxu0
    %v196 = vadd.f32 0.0, %v195
    %v197 = vpop.f32.mrb[0].mxu0
    %v198 = vpop.f32.mrb[0].mxu0
    %v199 = vpop.f32.mrb[0].mxu0
    %200 = vdwg.mxu0
    %v201 = vadd.f32 %v137, %v196
    %v202 = vld [vmem:[%s4] sm:$0x1]
    %v204 = vlaneseq
    %v205 = vshrl.u32 %v204, 7
    %v206 = vsub.s32 0, %v205
    %v207 = vrot.slane %v202, %v206
    %v209 = vmul.f32 %v201, %v207
    %vm210 = vcmask 293888
    %v211 = vsel %vm210, %v209, 0.0
    %212 = vadd.xlane.f32.xlu0 %v211
    %v213 = vpop.xlane.xlu0 %212
    %v214 = vmul.f32 %v213, 0.03125
    %v215 = vsub.f32 %v201, %v214
    %v216 = vmul.f32 %v215, %v215
    %v217 = vmul.f32 %v216, %v207
    %v218 = vsel %vm210, %v217, 0.0
    %219 = vadd.xlane.f32.xlu0 %v218
    %v220 = vpop.xlane.xlu0 %219
    %v221 = vmul.f32 %v220, 0.03125
    %v222 = vadd.f32 %v221, 1e-05
    %v223 = vrsqrt.pop %v222
    %v224 = vmul.f32 %v215, %v223
    %v225 = vld [vmem:[%s2] sm:$0xff]
    %227 = vset.pattern.permute.xlu0 0
    %228 = vperm.xlu0 %227, %v225
    %v229 = vpop.permute.xlu0 %228
    %v231 = vmul.f32 %v224, %v229
    %v232 = vld [vmem:[%s3] sm:$0xff]
    %234 = vset.pattern.permute.xlu0 0
    %235 = vperm.xlu0 %234, %v232
    %v236 = vpop.permute.xlu0 %235
    %v238 = vadd.f32 %v231, %v236
    %vm239 = vcmp.ge.f32.partialorder %v238, 0.0
    %v240 = vmul.f32 %v238, 0.01
    %v241 = vsel %vm239, %v238, %v240
    %v242 = vld [vmem:[%s5] sm:$0xff]
    %v243 = vld [vmem:[%s5 + $0x8] sm:$0xff]
    %v244 = vld [vmem:[%s5 + $0x10] sm:$0xff]
    %v245 = vld [vmem:[%s5 + $0x18] sm:$0xff]
    %v246 = vld [vmem:[%s5 + $0x20] sm:$0xf]
    %v248 = vsel %vm210, %v241, 0
    %vm250 = vcmask 1043456
    %v252 = vsel %vm250, %v246, 0
    %254 = vmatprep.subr.mxu0 0.0
    %255 = vmatpush1.msra.mxu0 %v242
    %256 = vmatprep.subr.mxu0 0.0
    %257 = vmatpush1.msra.mxu0 %v243
    %258 = vmatprep.subr.mxu0 0.0
    %259 = vmatpush1.msra.mxu0 %v244
    %260 = vmatprep.subr.mxu0 0.0
    %261 = vmatpush1.msra.mxu0 %v245
    %262 = vmatprep.subr.mxu0 0.0
    %263 = vmatpush1.msra.mxu0 %v252
    %264 = vmatprep.subr.mxu0 0.0
    %265 = vmatpush1.msra.mxu0 0.0
    %266 = vmatprep.subr.mxu0 0.0
    %267 = vmatpush1.msra.mxu0 0.0
    %268 = vmatprep.subr.mxu0 0.0
    %269 = vmatpush1.msra.mxu0 0.0
    %270 = vmatprep.subr.mxu0 0.0
    %271 = vmatpush1.msra.mxu0 0.0
    %272 = vmatprep.subr.mxu0 0.0
    %273 = vmatpush1.msra.mxu0 0.0
    %274 = vmatprep.subr.mxu0 0.0
    %275 = vmatpush1.msra.mxu0 0.0
    %276 = vmatprep.subr.mxu0 0.0
    %277 = vmatpush1.msra.mxu0 0.0
    %278 = vmatprep.subr.mxu0 0.0
    %279 = vmatpush1.msra.mxu0 0.0
    %280 = vmatprep.subr.mxu0 0.0
    %281 = vmatpush1.msra.mxu0 0.0
    %282 = vmatprep.subr.mxu0 0.0
    %283 = vmatpush1.msra.mxu0 0.0
    %284 = vmatprep.subr.mxu0 0.0
    %285 = vmatpush1.msra.mxu0 0.0
    %286 = vmatprep.subr.mxu0 0.0
    %287 = vmatpush1.msra.mxu0 0.0
    %288 = vmatprep.subr.mxu0 0.0
    %289 = vmatpush1.msra.mxu0 0.0
    %290 = vmatprep.subr.mxu0 0.0
    %291 = vmatpush1.msra.mxu0 0.0
    %292 = vmatprep.subr.mxu0 0.0
    %293 = vmatpush1.msra.mxu0 0.0
    %294 = vmatprep.subr.mxu0 0.0
    %295 = vmatpush1.msra.mxu0 0.0
    %296 = vmatprep.subr.mxu0 0.0
    %297 = vmatpush1.msra.mxu0 0.0
    %298 = vmatprep.subr.mxu0 0.0
    %299 = vmatpush1.msra.mxu0 0.0
    %300 = vmatprep.subr.mxu0 0.0
    %301 = vmatpush1.msra.mxu0 0.0
    %302 = vmatprep.subr.mxu0 0.0
    %303 = vmatpush1.msra.mxu0 0.0
    %304 = vmatprep.subr.mxu0 0.0
    %305 = vmatpush1.msra.mxu0 0.0
    %306 = vmatprep.subr.mxu0 0.0
    %307 = vmatpush1.msra.mxu0 0.0
    %308 = vmatprep.subr.mxu0 0.0
    %309 = vmatpush1.msra.mxu0 0.0
    %310 = vmatprep.subr.mxu0 0.0
    %311 = vmatpush1.msra.mxu0 0.0
    %312 = vmatprep.subr.mxu0 0.0
    %313 = vmatpush1.msra.mxu0 0.0
    %314 = vmatprep.subr.mxu0 0.0
    %315 = vmatpush1.msra.mxu0 0.0
    %316 = vmatprep.subr.mxu0 0.0
    %317 = vmatpush1.msra.mxu0 0.0
    %318 = vmatprep.mubr.f32.mxu0 0.0
    %319 = vmatmul.mubr.f32.gmra.mrb[0].mxu0 %v248
    %v320 = vpop.f32.mrb[0].mxu0
    %v321 = vadd.f32 0.0, %v320
    %v322 = vpop.f32.mrb[0].mxu0
    %323 = vdwg.mxu0
    %v324 = vld [vmem:[%s6] sm:$0xff]
    %v325 = vld [vmem:[%s6 + $0x8] sm:$0xff]
    %v326 = vld [vmem:[%s6 + $0x10] sm:$0xff]
    %v327 = vld [vmem:[%s6 + $0x18] sm:$0xff]
    %v328 = vld [vmem:[%s6 + $0x20] sm:$0xf]
    %v330 = vsel %vm250, %v328, 0
    %332 = vmatprep.subr.mxu0 0.0
    %333 = vmatpush1.msra.mxu0 %v324
    %334 = vmatprep.subr.mxu0 0.0
    %335 = vmatpush1.msra.mxu0 %v325
    %336 = vmatprep.subr.mxu0 0.0
    %337 = vmatpush1.msra.mxu0 %v326
    %338 = vmatprep.subr.mxu0 0.0
    %339 = vmatpush1.msra.mxu0 %v327
    %340 = vmatprep.subr.mxu0 0.0
    %341 = vmatpush1.msra.mxu0 %v330
    %342 = vmatprep.subr.mxu0 0.0
    %343 = vmatpush1.msra.mxu0 0.0
    %344 = vmatprep.subr.mxu0 0.0
    %345 = vmatpush1.msra.mxu0 0.0
    %346 = vmatprep.subr.mxu0 0.0
    %347 = vmatpush1.msra.mxu0 0.0
    %348 = vmatprep.subr.mxu0 0.0
    %349 = vmatpush1.msra.mxu0 0.0
    %350 = vmatprep.subr.mxu0 0.0
    %351 = vmatpush1.msra.mxu0 0.0
    %352 = vmatprep.subr.mxu0 0.0
    %353 = vmatpush1.msra.mxu0 0.0
    %354 = vmatprep.subr.mxu0 0.0
    %355 = vmatpush1.msra.mxu0 0.0
    %356 = vmatprep.subr.mxu0 0.0
    %357 = vmatpush1.msra.mxu0 0.0
    %358 = vmatprep.subr.mxu0 0.0
    %359 = vmatpush1.msra.mxu0 0.0
    %360 = vmatprep.subr.mxu0 0.0
    %361 = vmatpush1.msra.mxu0 0.0
    %362 = vmatprep.subr.mxu0 0.0
    %363 = vmatpush1.msra.mxu0 0.0
    %364 = vmatprep.subr.mxu0 0.0
    %365 = vmatpush1.msra.mxu0 0.0
    %366 = vmatprep.subr.mxu0 0.0
    %367 = vmatpush1.msra.mxu0 0.0
    %368 = vmatprep.subr.mxu0 0.0
    %369 = vmatpush1.msra.mxu0 0.0
    %370 = vmatprep.subr.mxu0 0.0
    %371 = vmatpush1.msra.mxu0 0.0
    %372 = vmatprep.subr.mxu0 0.0
    %373 = vmatpush1.msra.mxu0 0.0
    %374 = vmatprep.subr.mxu0 0.0
    %375 = vmatpush1.msra.mxu0 0.0
    %376 = vmatprep.subr.mxu0 0.0
    %377 = vmatpush1.msra.mxu0 0.0
    %378 = vmatprep.subr.mxu0 0.0
    %379 = vmatpush1.msra.mxu0 0.0
    %380 = vmatprep.subr.mxu0 0.0
    %381 = vmatpush1.msra.mxu0 0.0
    %382 = vmatprep.subr.mxu0 0.0
    %383 = vmatpush1.msra.mxu0 0.0
    %384 = vmatprep.subr.mxu0 0.0
    %385 = vmatpush1.msra.mxu0 0.0
    %386 = vmatprep.subr.mxu0 0.0
    %387 = vmatpush1.msra.mxu0 0.0
    %388 = vmatprep.subr.mxu0 0.0
    %389 = vmatpush1.msra.mxu0 0.0
    %390 = vmatprep.subr.mxu0 0.0
    %391 = vmatpush1.msra.mxu0 0.0
    %392 = vmatprep.subr.mxu0 0.0
    %393 = vmatpush1.msra.mxu0 0.0
    %394 = vmatprep.subr.mxu0 0.0
    %395 = vmatpush1.msra.mxu0 0.0
    %396 = vmatprep.mubr.f32.mxu0 0.0
    %397 = vmatmul.mubr.f32.gmra.mrb[0].mxu0 %v248
    %v398 = vpop.f32.mrb[0].mxu0
    %v399 = vadd.f32 0.0, %v398
    %v400 = vpop.f32.mrb[0].mxu0
    %401 = vdwg.mxu0
    %v402 = vld [vmem:[%s7] sm:$0xff]
    %v403 = vld [vmem:[%s7 + $0x8] sm:$0xff]
    %v404 = vld [vmem:[%s7 + $0x10] sm:$0xff]
    %v405 = vld [vmem:[%s7 + $0x18] sm:$0xff]
    %v406 = vld [vmem:[%s7 + $0x20] sm:$0xf]
    %v408 = vsel %vm250, %v406, 0
    %410 = vmatprep.subr.mxu0 0.0
    %411 = vmatpush1.msra.mxu0 %v402
    %412 = vmatprep.subr.mxu0 0.0
    %413 = vmatpush1.msra.mxu0 %v403
    %414 = vmatprep.subr.mxu0 0.0
    %415 = vmatpush1.msra.mxu0 %v404
    %416 = vmatprep.subr.mxu0 0.0
    %417 = vmatpush1.msra.mxu0 %v405
    %418 = vmatprep.subr.mxu0 0.0
    %419 = vmatpush1.msra.mxu0 %v408
    %420 = vmatprep.subr.mxu0 0.0
    %421 = vmatpush1.msra.mxu0 0.0
    %422 = vmatprep.subr.mxu0 0.0
    %423 = vmatpush1.msra.mxu0 0.0
    %424 = vmatprep.subr.mxu0 0.0
    %425 = vmatpush1.msra.mxu0 0.0
    %426 = vmatprep.subr.mxu0 0.0
    %427 = vmatpush1.msra.mxu0 0.0
    %428 = vmatprep.subr.mxu0 0.0
    %429 = vmatpush1.msra.mxu0 0.0
    %430 = vmatprep.subr.mxu0 0.0
    %431 = vmatpush1.msra.mxu0 0.0
    %432 = vmatprep.subr.mxu0 0.0
    %433 = vmatpush1.msra.mxu0 0.0
    %434 = vmatprep.subr.mxu0 0.0
    %435 = vmatpush1.msra.mxu0 0.0
    %436 = vmatprep.subr.mxu0 0.0
    %437 = vmatpush1.msra.mxu0 0.0
    %438 = vmatprep.subr.mxu0 0.0
    %439 = vmatpush1.msra.mxu0 0.0
    %440 = vmatprep.subr.mxu0 0.0
    %441 = vmatpush1.msra.mxu0 0.0
    %442 = vmatprep.subr.mxu0 0.0
    %443 = vmatpush1.msra.mxu0 0.0
    %444 = vmatprep.subr.mxu0 0.0
    %445 = vmatpush1.msra.mxu0 0.0
    %446 = vmatprep.subr.mxu0 0.0
    %447 = vmatpush1.msra.mxu0 0.0
    %448 = vmatprep.subr.mxu0 0.0
    %449 = vmatpush1.msra.mxu0 0.0
    %450 = vmatprep.subr.mxu0 0.0
    %451 = vmatpush1.msra.mxu0 0.0
    %452 = vmatprep.subr.mxu0 0.0
    %453 = vmatpush1.msra.mxu0 0.0
    %454 = vmatprep.subr.mxu0 0.0
    %455 = vmatpush1.msra.mxu0 0.0
    %456 = vmatprep.subr.mxu0 0.0
    %457 = vmatpush1.msra.mxu0 0.0
    %458 = vmatprep.subr.mxu0 0.0
    %459 = vmatpush1.msra.mxu0 0.0
    %460 = vmatprep.subr.mxu0 0.0
    %461 = vmatpush1.msra.mxu0 0.0
    %462 = vmatprep.subr.mxu0 0.0
    %463 = vmatpush1.msra.mxu0 0.0
    %464 = vmatprep.subr.mxu0 0.0
    %465 = vmatpush1.msra.mxu0 0.0
    %466 = vmatprep.subr.mxu0 0.0
    %467 = vmatpush1.msra.mxu0 0.0
    %468 = vmatprep.subr.mxu0 0.0
    %469 = vmatpush1.msra.mxu0 0.0
    %470 = vmatprep.subr.mxu0 0.0
    %471 = vmatpush1.msra.mxu0 0.0
    %472 = vmatprep.subr.mxu0 0.0
    %473 = vmatpush1.msra.mxu0 0.0
    %474 = vmatprep.mubr.f32.mxu0 0.0
    %475 = vmatmul.mubr.f32.gmra.mrb[0].mxu0 %v248
    %v476 = vpop.f32.mrb[0].mxu0
    %v477 = vadd.f32 0.0, %v476
    %v478 = vpop.f32.mrb[0].mxu0
    %479 = vdwg.mxu0
    %v480 = vmax.f32 %v321, %v399
    %v481 = vmax.f32 %v480, %v477
    %v482 = vld [vmem:[%s8] sm:$0xff]
    %v483 = vld [vmem:[%s8 + $0x8] sm:$0xff]
    %vm484 = vcmask 130048
    %v486 = vsel %vm484, %v481, 0
    %488 = vmatprep.subr.mxu0 0.0
    %489 = vmatpush1.msra.mxu0 %v482
    %490 = vmatprep.subr.mxu0 0.0
    %491 = vmatpush1.msra.mxu0 %v483
    %492 = vmatprep.subr.mxu0 0.0
    %493 = vmatpush1.msra.mxu0 0.0
    %494 = vmatprep.subr.mxu0 0.0
    %495 = vmatpush1.msra.mxu0 0.0
    %496 = vmatprep.subr.mxu0 0.0
    %497 = vmatpush1.msra.mxu0 0.0
    %498 = vmatprep.subr.mxu0 0.0
    %499 = vmatpush1.msra.mxu0 0.0
    %500 = vmatprep.subr.mxu0 0.0
    %501 = vmatpush1.msra.mxu0 0.0
    %502 = vmatprep.subr.mxu0 0.0
    %503 = vmatpush1.msra.mxu0 0.0
    %504 = vmatprep.subr.mxu0 0.0
    %505 = vmatpush1.msra.mxu0 0.0
    %506 = vmatprep.subr.mxu0 0.0
    %507 = vmatpush1.msra.mxu0 0.0
    %508 = vmatprep.subr.mxu0 0.0
    %509 = vmatpush1.msra.mxu0 0.0
    %510 = vmatprep.subr.mxu0 0.0
    %511 = vmatpush1.msra.mxu0 0.0
    %512 = vmatprep.subr.mxu0 0.0
    %513 = vmatpush1.msra.mxu0 0.0
    %514 = vmatprep.subr.mxu0 0.0
    %515 = vmatpush1.msra.mxu0 0.0
    %516 = vmatprep.subr.mxu0 0.0
    %517 = vmatpush1.msra.mxu0 0.0
    %518 = vmatprep.subr.mxu0 0.0
    %519 = vmatpush1.msra.mxu0 0.0
    %520 = vmatprep.subr.mxu0 0.0
    %521 = vmatpush1.msra.mxu0 0.0
    %522 = vmatprep.subr.mxu0 0.0
    %523 = vmatpush1.msra.mxu0 0.0
    %524 = vmatprep.subr.mxu0 0.0
    %525 = vmatpush1.msra.mxu0 0.0
    %526 = vmatprep.subr.mxu0 0.0
    %527 = vmatpush1.msra.mxu0 0.0
    %528 = vmatprep.subr.mxu0 0.0
    %529 = vmatpush1.msra.mxu0 0.0
    %530 = vmatprep.subr.mxu0 0.0
    %531 = vmatpush1.msra.mxu0 0.0
    %532 = vmatprep.subr.mxu0 0.0
    %533 = vmatpush1.msra.mxu0 0.0
    %534 = vmatprep.subr.mxu0 0.0
    %535 = vmatpush1.msra.mxu0 0.0
    %536 = vmatprep.subr.mxu0 0.0
    %537 = vmatpush1.msra.mxu0 0.0
    %538 = vmatprep.subr.mxu0 0.0
    %539 = vmatpush1.msra.mxu0 0.0
    %540 = vmatprep.subr.mxu0 0.0
    %541 = vmatpush1.msra.mxu0 0.0
    %542 = vmatprep.subr.mxu0 0.0
    %543 = vmatpush1.msra.mxu0 0.0
    %544 = vmatprep.subr.mxu0 0.0
    %545 = vmatpush1.msra.mxu0 0.0
    %546 = vmatprep.subr.mxu0 0.0
    %547 = vmatpush1.msra.mxu0 0.0
    %548 = vmatprep.subr.mxu0 0.0
    %549 = vmatpush1.msra.mxu0 0.0
    %550 = vmatprep.subr.mxu0 0.0
    %551 = vmatpush1.msra.mxu0 0.0
    %552 = vmatprep.mubr.f32.mxu0 0.0
    %553 = vmatmul.mubr.f32.gmra.mrb[0].mxu0 %v486
    %v554 = vpop.f32.mrb[0].mxu0
    %v555 = vadd.f32 0.0, %v554
    %v556 = vpop.f32.mrb[0].mxu0
    %557 = vdwg.mxu0
    %vm558 = vcmask 261120
    %559 = vst.msk [vmem:[#allocation2] sm:$0xff] %vm558, %v555
    // Predicated region
    $region38: #{tpu_custom_call.1} parent=1 // pred_check
      _
    $region39: #{tpu_custom_call.1} parent=1 // pred_check_branch
      %561 = sbr.rel (0) target = $region41
    $region40: #{tpu_custom_call.1} parent=1 // pred_region
      %s563 = ssub.s32 128, 128
      %564 = vsyncadd [#allocation3], %s563
      %s566 = sshll.u32 [#allocation2], 4
      %s567 = int_to_ptr.vmem [resolvable:$true] %s566
      %569 = dma.vmem_to_hbm [thread:$0]  %s567, 128, %s9, [#allocation3]
    $region41: #{tpu_custom_call.1} parent=1 // pred_fallthru
      _
    // Predicated region
    $region42: #{tpu_custom_call.1} parent=1 // pred_check
      _
    $region43: #{tpu_custom_call.1} parent=1 // pred_check_branch
      %571 = sbr.rel (0) target = $region45
    $region44: #{tpu_custom_call.1} parent=1 // pred_region
      %572 = dma.done [#allocation3], 128
    $region45: #{tpu_custom_call.1} parent=1 // pred_fallthru
      _
    %573 = vsyncpa [#allocation3], 1

</llo_original>
